<compile_context>
chip_gen: v5e
topology: v5e:2x2
jax: 0.10.0
libtpu: 0.0.40
codegen_flags: <defaults>
</compile_context>

<pallas_src>
import jax
import jax.numpy as jnp
from jax.experimental import pallas as pl
from jax.experimental.pallas import tpu as pltpu


# ----------------------------- Pallas kernels -------------------------------

def _project_kernel(x_ref, w_ref, h_ref):
    # x_ref: (N, in_dim), w_ref: (in_dim, H*D), h_ref: (N, H*D)
    h_ref[...] = jnp.dot(x_ref[...], w_ref[...], preferred_element_type=jnp.float32)


def project_heads(x, w_flat):
    """h2 = x @ w_flat, one lane-dense MXU matmul covering all heads."""
    N, in_dim = x.shape
    HD = w_flat.shape[1]
    return pl.pallas_call(
        _project_kernel,
        out_shape=jax.ShapeDtypeStruct((N, HD), jnp.float32),
        grid_spec=pltpu.PrefetchScalarGridSpec(
            num_scalar_prefetch=0,
            grid=(1,),
            in_specs=[
                pl.BlockSpec((N, in_dim), lambda i: (0, 0)),
                pl.BlockSpec((in_dim, HD), lambda i: (0, 0)),
            ],
            out_specs=pl.BlockSpec((N, HD), lambda i: (0, 0)),
        ),
        compiler_params=pltpu.CompilerParams(dimension_semantics=("arbitrary",)),
    )(x, w_flat)


def _attn_agg_kernel(h_ref, hin_ref, a1_ref, ct_ref, attn_ref, out_ref):
    # h_ref:    (1, N, D)  proper per-head projection h[k]
    # hin_ref:  (1, N, D)  head-interleaved rows used by the reference's a_input view
    # a1_ref:   (1, 1, D)  first half of a[k]
    # ct_ref:   (1, D, N)  pattern matrix folding a[k, D:] with the a_output view map
    # attn_ref: (1, N, N)  softmax attention (lane-dense; wrapper reshapes to (N², 1))
    # out_ref:  (1, 1, D)  per-head aggregated output
    h_k = h_ref[0]                                                     # (N, D)
    hin_k = hin_ref[0]                                                 # (N, D)
    a1_k = a1_ref[0]                                                   # (1, D)
    ct_k = ct_ref[0]                                                   # (D, N)

    # score[q, m] = s_in[q] + s_out[q, m]   (exactly  feat @ a  of the reference)
    s_in = jnp.sum(hin_k * a1_k, axis=-1, keepdims=True)               # (N, 1)  VPU reduce
    s_out = jnp.dot(h_k, ct_k, preferred_element_type=jnp.float32)     # (N, N)  MXU
    score = s_in + s_out
    score = jnp.where(score >= 0, score, 0.2 * score)                  # LeakyReLU(0.2)

    # softmax over the full N*N pair axis (dim=1 of the reference's (H, N², 1))
    mx = jnp.max(jnp.max(score, axis=1, keepdims=True), axis=0, keepdims=True)   # (1, 1)
    e = jnp.exp(score - mx)
    denom = jnp.sum(jnp.sum(e, axis=1, keepdims=True), axis=0, keepdims=True)    # (1, 1)
    attn = e * pl.reciprocal(denom, approx=False)                      # (N, N)
    attn_ref[0] = attn

    # head_out = sum_p attn[p] * h[k, p // N]  ==  (row-sum over m) weighted sum of h rows.
    row_w = jnp.sum(attn, axis=1, keepdims=True)                       # (N, 1)
    out_ref[0] = jnp.sum(row_w * h_k, axis=0, keepdims=True)           # (1, D)


def attention_and_aggregate(h, h_in, a1, ct):
    H, N, D = h.shape
    return pl.pallas_call(
        _attn_agg_kernel,
        out_shape=(
            jax.ShapeDtypeStruct((H, N, N), jnp.float32),   # lane-dense softmax attention
            jax.ShapeDtypeStruct((H, 1, D), jnp.float32),   # per-head aggregated output
        ),
        grid_spec=pltpu.PrefetchScalarGridSpec(
            num_scalar_prefetch=0,
            grid=(H,),
            in_specs=[
                pl.BlockSpec((1, N, D), lambda k: (k, 0, 0)),
                pl.BlockSpec((1, N, D), lambda k: (k, 0, 0)),
                pl.BlockSpec((1, 1, D), lambda k: (k, 0, 0)),
                pl.BlockSpec((1, D, N), lambda k: (k, 0, 0)),
            ],
            out_specs=(
                pl.BlockSpec((1, N, N), lambda k: (k, 0, 0)),
                pl.BlockSpec((1, 1, D), lambda k: (k, 0, 0)),
            ),
        ),
        # heads are independent -> shard across TensorCores on v7x, harmless elsewhere
        compiler_params=pltpu.CompilerParams(dimension_semantics=("parallel",)),
    )(h, h_in, a1, ct)


# ------------------------------ forward pass --------------------------------

def gat_forward(x, w, a_param):
    N, in_dim = x.shape
    H, _, D = w.shape

    # ---- projection: h2[n, i*D + d] = (x @ w[i])[n, d]  (single MXU matmul) ----
    w_flat = jnp.transpose(w, (1, 0, 2)).reshape(in_dim, H * D)        # param reshape only
    h2 = project_heads(x, w_flat)                                      # (N, H*D)

    # ---- O(H*N*D) layout glue implied by the reference's repeat/cat/.view ----
    # proper per-head h:  h[i, n] = x @ w[i]
    h = jnp.transpose(h2.reshape(N, H, D), (1, 0, 2))                  # (H, N, D)
    # head-interleaved rows used by a_input.view:  h_in[k, q] = h[(k*N+q) % H, (k*N+q) // H]
    h_in = h2.reshape(H, N, D)                                         # (H, N, D)

    a1 = a_param[:, :D, 0]                                             # (H, D)
    a2 = a_param[:, D:, 0]                                             # (H, D)

    # a_output_view[k, q*N+m, e] = h[k, q, (m*D+e)//N]; fold a2 into CT so the score's
    # second half becomes a dense (N,D)@(D,N) matmul inside the kernel.
    d_map = (jnp.arange(N)[:, None] * D + jnp.arange(D)[None, :]) // N   # (N, D) int
    onehot = jax.nn.one_hot(d_map, D, dtype=jnp.float32)                 # (N, D, D): [m, e, d']
    ct = jnp.einsum('ke,med->kdm', a2, onehot)                           # (H, D, N)

    # ---- fused attention + aggregation (all N²-sized work stays in VMEM) ----
    attn3, head_out = attention_and_aggregate(h, h_in, a1.reshape(H, 1, D), ct)

    # TODO(synk): the reference's final line
    #   torch.matmul(a.transpose(1, 2), h.transpose(0, 1)).squeeze().transpose(0, 1)
    # is ill-typed for EVERY input shape (inner dim N*N can never equal num_heads while
    # the batch dims num_heads and N also fail to broadcast), so it cannot execute in
    # PyTorch at all.  We implement the closest well-typed reading: per-head
    # attention-weighted sum of node features, then squeeze + transpose -> (out_dim, H).
    output = jnp.squeeze(head_out, axis=1).T                            # (out_dim, H)
    attn = attn3.reshape(H, N * N, 1)                                   # reference shape
    return output, attn


# --------------------- pure-JAX reference (literal construction) -------------

def _reference_forward(x, w, a_param):
    N = x.shape[0]
    H, _, D = w.shape
    h = jnp.stack([x @ w[i] for i in range(H)])                                      # (H,N,D)
    a_input = jnp.concatenate(
        [jnp.tile(h[i][:, None, :], (1, N, 1)) for i in range(H)], axis=1)           # (N,H*N,D)
    a_output = jnp.concatenate(
        [jnp.tile(h[i][:, :, None], (1, 1, N)) for i in range(H)], axis=0)           # (H*N,D,N)
    a_input = a_input.reshape(H, N * N, -1)
    a_output = a_output.reshape(H, N * N, -1)
    feat = jnp.concatenate([a_input, a_output], axis=2)                              # (H,N²,2D)
    s = jnp.einsum('hpe,heo->hpo', feat, a_param)                                    # (H,N²,1)
    s = jnp.where(s >= 0, s, 0.2 * s)
    s = jax.nn.softmax(s, axis=1)
    h_pairs = jnp.repeat(h, N, axis=1)                                               # (H,N²,D)
    head_out = jnp.einsum('hpo,hpd->hod', s, h_pairs)                                # (H,1,D)
    return jnp.squeeze(head_out, axis=1).T, s


# ------------------------------- parameters ---------------------------------

def xavier_uniform(key, shape, gain):
    """Matches torch.nn.init.xavier_uniform_ fan computation for >2-D tensors."""
    receptive = 1
    for s in shape[2:]:
        receptive *= s
    fan_in = shape[1] * receptive
    fan_out = shape[0] * receptive
    bound = gain * (6.0 / (fan_in + fan_out)) ** 0.5
    return jax.random.uniform(key, shape, jnp.float32, -bound, bound)


# --------------------------------- driver -----------------------------------

if __name__ == "__main__":
    key = jax.random.PRNGKey(0)
    kx, kw, ka = jax.random.split(key, 3)

    num_nodes, in_dim, out_dim, num_heads = 8, 16, 32, 4

    x = jax.random.normal(kx, (num_nodes, in_dim), jnp.float32)
    w = xavier_uniform(kw, (num_heads, in_dim, out_dim), gain=1.414)
    a_param = xavier_uniform(ka, (num_heads, 2 * out_dim, 1), gain=1.414)

    fwd = jax.jit(gat_forward)
    output, attn = fwd(x, w, a_param)
    jax.block_until_ready((output, attn))

    assert output.shape == (out_dim, num_heads)
    assert attn.shape == (num_heads, num_nodes * num_nodes, 1)
    # softmax rows must sum to 1 per head
    assert bool(jnp.allclose(jnp.sum(attn, axis=1), 1.0, atol=1e-5))

    # cross-check the fused/decomposed kernels against the literal construction
    ref_out, ref_attn = _reference_forward(x, w, a_param)
    assert bool(jnp.allclose(output, ref_out, rtol=1e-3, atol=1e-3))
    assert bool(jnp.allclose(attn, ref_attn, rtol=1e-3, atol=1e-3))

    print("KERNEL_OK")
</pallas_src>

<mosaic_0001>
module attributes {stable_mosaic.version = 11 : i64} {
  func.func @_project_kernel(%arg0: i32, %arg1: memref<8x16xf32, #tpu.memory_space<vmem>>, %arg2: memref<16x128xf32, #tpu.memory_space<vmem>>, %arg3: memref<8x128xf32, #tpu.memory_space<vmem>>) attributes {dimension_semantics = [#tpu.dimension_semantics<arbitrary>], iteration_bounds = array<i64: 1>, scalar_prefetch = 0 : i64, scratch_operands = 0 : i64, tpu.core_type = #tpu.core_type<tc>, window_params = [{pipeline_mode = #tpu.pipeline_mode<synchronous>, transform_indices = @transform_0, window_bounds = array<i64: 8, 16>}, {pipeline_mode = #tpu.pipeline_mode<synchronous>, transform_indices = @transform_1, window_bounds = array<i64: 16, 128>}, {pipeline_mode = #tpu.pipeline_mode<synchronous>, transform_indices = @transform_2, window_bounds = array<i64: 8, 128>}]} {
    %c0 = arith.constant 0 : index
    %c0_0 = arith.constant 0 : index
    %0 = vector.load %arg1[%c0, %c0_0] : memref<8x16xf32, #tpu.memory_space<vmem>>, vector<8x16xf32>
    %c0_1 = arith.constant 0 : index
    %c0_2 = arith.constant 0 : index
    %1 = vector.load %arg2[%c0_1, %c0_2] : memref<16x128xf32, #tpu.memory_space<vmem>>, vector<16x128xf32>
    %cst = arith.constant dense<0.000000e+00> : vector<8x128xf32>
    %2 = tpu.matmul %0, %1, %cst {dimension_numbers = #tpu.dot_dimension_numbers<[1], [0], [0], [1], [0, 0, 1, 1], [], []>} : vector<8x16xf32>, vector<16x128xf32>, vector<8x128xf32> -> vector<8x128xf32>
    %c0_3 = arith.constant 0 : index
    %c0_4 = arith.constant 0 : index
    %3 = vector.load %arg3[%c0_3, %c0_4] : memref<8x128xf32, #tpu.memory_space<vmem>>, vector<8x128xf32>
    tpu.vector_store %arg3[%c0_3, %c0_4], %2 {strides = array<i32>} : memref<8x128xf32, #tpu.memory_space<vmem>>, vector<8x128xf32>,
    return
  }
  func.func @transform_0(%arg0: i32) -> (i32, i32) {
    %c0_i32 = arith.constant 0 : i32
    %c0_i32_0 = arith.constant 0 : i32
    %c0_i32_1 = arith.constant 0 : i32
    return %c0_i32, %c0_i32_0 : i32, i32
  }
  func.func @transform_1(%arg0: i32) -> (i32, i32) {
    %c0_i32 = arith.constant 0 : i32
    %c0_i32_0 = arith.constant 0 : i32
    %c0_i32_1 = arith.constant 0 : i32
    return %c0_i32, %c0_i32_0 : i32, i32
  }
  func.func @transform_2(%arg0: i32) -> (i32, i32) {
    %c0_i32 = arith.constant 0 : i32
    %c0_i32_0 = arith.constant 0 : i32
    %c0_i32_1 = arith.constant 0 : i32
    return %c0_i32, %c0_i32_0 : i32, i32
  }
}

module attributes {stable_mosaic.version = 11 : i64} {
  func.func @_attn_agg_kernel(%arg0: i32, %arg1: memref<1x8x32xf32, #tpu.memory_space<vmem>>, %arg2: memref<1x8x32xf32, #tpu.memory_space<vmem>>, %arg3: memref<1x1x32xf32, #tpu.memory_space<vmem>>, %arg4: memref<1x32x8xf32, #tpu.memory_space<vmem>>, %arg5: memref<1x8x8xf32, #tpu.memory_space<vmem>>, %arg6: memref<1x1x32xf32, #tpu.memory_space<vmem>>) attributes {dimension_semantics = [#tpu.dimension_semantics<parallel>], iteration_bounds = array<i64: 4>, scalar_prefetch = 0 : i64, scratch_operands = 0 : i64, tpu.core_type = #tpu.core_type<tc>, window_params = [{transform_indices = @transform_0, window_bounds = array<i64: 1, 8, 32>}, {transform_indices = @transform_1, window_bounds = array<i64: 1, 8, 32>}, {transform_indices = @transform_2, window_bounds = array<i64: 1, 1, 32>}, {transform_indices = @transform_3, window_bounds = array<i64: 1, 32, 8>}, {transform_indices = @transform_4, window_bounds = array<i64: 1, 8, 8>}, {transform_indices = @transform_5, window_bounds = array<i64: 1, 1, 32>}]} {
    %c0 = arith.constant 0 : index
    %c0_0 = arith.constant 0 : index
    %c0_1 = arith.constant 0 : index
    %0 = vector.load %arg1[%c0, %c0_0, %c0_1] : memref<1x8x32xf32, #tpu.memory_space<vmem>>, vector<1x8x32xf32>
    %1 = vector.shape_cast %0 : vector<1x8x32xf32> to vector<8x32xf32>
    %c0_2 = arith.constant 0 : index
    %c0_3 = arith.constant 0 : index
    %c0_4 = arith.constant 0 : index
    %2 = vector.load %arg2[%c0_2, %c0_3, %c0_4] : memref<1x8x32xf32, #tpu.memory_space<vmem>>, vector<1x8x32xf32>
    %3 = vector.shape_cast %2 : vector<1x8x32xf32> to vector<8x32xf32>
    %c0_5 = arith.constant 0 : index
    %c0_6 = arith.constant 0 : index
    %c0_7 = arith.constant 0 : index
    %4 = vector.load %arg3[%c0_5, %c0_6, %c0_7] : memref<1x1x32xf32, #tpu.memory_space<vmem>>, vector<1x1x32xf32>
    %5 = vector.shape_cast %4 : vector<1x1x32xf32> to vector<1x32xf32>
    %c0_8 = arith.constant 0 : index
    %c0_9 = arith.constant 0 : index
    %c0_10 = arith.constant 0 : index
    %6 = vector.load %arg4[%c0_8, %c0_9, %c0_10] : memref<1x32x8xf32, #tpu.memory_space<vmem>>, vector<1x32x8xf32>
    %7 = vector.shape_cast %6 : vector<1x32x8xf32> to vector<32x8xf32>
    %8 = vector.broadcast %5 : vector<1x32xf32> to vector<8x32xf32>
    %9 = arith.mulf %3, %8 : vector<8x32xf32>
    %cst = arith.constant dense<0.000000e+00> : vector<8xf32>
    %10 = vector.multi_reduction <add>, %9, %cst [1] : vector<8x32xf32> to vector<8xf32>
    %11 = vector.shape_cast %10 : vector<8xf32> to vector<8x1xf32>
    %cst_11 = arith.constant dense<0.000000e+00> : vector<8x8xf32>
    %12 = tpu.matmul %1, %7, %cst_11 {dimension_numbers = #tpu.dot_dimension_numbers<[1], [0], [0], [1], [0, 0, 1, 1], [], []>} : vector<8x32xf32>, vector<32x8xf32>, vector<8x8xf32> -> vector<8x8xf32>
    %13 = vector.broadcast %11 : vector<8x1xf32> to vector<8x8xf32>
    %14 = arith.addf %13, %12 : vector<8x8xf32>
    %cst_12 = arith.constant 0.000000e+00 : f32
    %15 = vector.broadcast %cst_12 : f32 to vector<8x8xf32>
    %16 = arith.cmpf oge, %14, %15 : vector<8x8xf32>
    %cst_13 = arith.constant 2.000000e-01 : f32
    %17 = vector.broadcast %cst_13 : f32 to vector<8x8xf32>
    %18 = arith.mulf %17, %14 : vector<8x8xf32>
    %19 = arith.select %16, %14, %18 : vector<8x8xi1>, vector<8x8xf32>
    %cst_14 = arith.constant dense<0xFF800000> : vector<8xf32>
    %20 = vector.multi_reduction <maximumf>, %19, %cst_14 [1] : vector<8x8xf32> to vector<8xf32>
    %21 = vector.shape_cast %20 : vector<8xf32> to vector<8x1xf32>
    %cst_15 = arith.constant dense<0xFF800000> : vector<1xf32>
    %22 = vector.multi_reduction <maximumf>, %21, %cst_15 [0] : vector<8x1xf32> to vector<1xf32>
    %23 = vector.shape_cast %22 : vector<1xf32> to vector<1x1xf32>
    %24 = vector.broadcast %23 : vector<1x1xf32> to vector<8x8xf32>
    %25 = arith.subf %19, %24 : vector<8x8xf32>
    %26 = math.exp %25 : vector<8x8xf32>
    %cst_16 = arith.constant dense<0.000000e+00> : vector<8xf32>
    %27 = vector.multi_reduction <add>, %26, %cst_16 [1] : vector<8x8xf32> to vector<8xf32>
    %28 = vector.shape_cast %27 : vector<8xf32> to vector<8x1xf32>
    %cst_17 = arith.constant dense<0.000000e+00> : vector<1xf32>
    %29 = vector.multi_reduction <add>, %28, %cst_17 [0] : vector<8x1xf32> to vector<1xf32>
    %30 = vector.shape_cast %29 : vector<1xf32> to vector<1x1xf32>
    %31 = tpu.reciprocal %30 : vector<1x1xf32> -> vector<1x1xf32>
    %32 = vector.broadcast %31 : vector<1x1xf32> to vector<8x8xf32>
    %33 = arith.mulf %26, %32 : vector<8x8xf32>
    %c0_18 = arith.constant 0 : index
    %c0_19 = arith.constant 0 : index
    %c0_20 = arith.constant 0 : index
    %34 = vector.load %arg5[%c0_18, %c0_19, %c0_20] : memref<1x8x8xf32, #tpu.memory_space<vmem>>, vector<1x8x8xf32>
    %35 = vector.shape_cast %34 : vector<1x8x8xf32> to vector<8x8xf32>
    %36 = vector.shape_cast %33 : vector<8x8xf32> to vector<1x8x8xf32>
    tpu.vector_store %arg5[%c0_18, %c0_19, %c0_20], %36 {strides = array<i32>} : memref<1x8x8xf32, #tpu.memory_space<vmem>>, vector<1x8x8xf32>,
    %cst_21 = arith.constant dense<0.000000e+00> : vector<8xf32>
    %37 = vector.multi_reduction <add>, %33, %cst_21 [1] : vector<8x8xf32> to vector<8xf32>
    %38 = vector.shape_cast %37 : vector<8xf32> to vector<8x1xf32>
    %39 = vector.broadcast %38 : vector<8x1xf32> to vector<8x32xf32>
    %40 = arith.mulf %39, %1 : vector<8x32xf32>
    %cst_22 = arith.constant dense<0.000000e+00> : vector<32xf32>
    %41 = vector.multi_reduction <add>, %40, %cst_22 [0] : vector<8x32xf32> to vector<32xf32>
    %42 = vector.shape_cast %41 : vector<32xf32> to vector<1x32xf32>
    %c0_23 = arith.constant 0 : index
    %c0_24 = arith.constant 0 : index
    %c0_25 = arith.constant 0 : index
    %43 = vector.load %arg6[%c0_23, %c0_24, %c0_25] : memref<1x1x32xf32, #tpu.memory_space<vmem>>, vector<1x1x32xf32>
    %44 = vector.shape_cast %43 : vector<1x1x32xf32> to vector<1x32xf32>
    %45 = vector.shape_cast %42 : vector<1x32xf32> to vector<1x1x32xf32>
    tpu.vector_store %arg6[%c0_23, %c0_24, %c0_25], %45 {strides = array<i32>} : memref<1x1x32xf32, #tpu.memory_space<vmem>>, vector<1x1x32xf32>,
    return
  }
  func.func @transform_0(%arg0: i32) -> (i32, i32, i32) {
    %c0_i32 = arith.constant 0 : i32
    %c0_i32_0 = arith.constant 0 : i32
    %c0_i32_1 = arith.constant 0 : i32
    return %arg0, %c0_i32, %c0_i32_0 : i32, i32, i32
  }
  func.func @transform_1(%arg0: i32) -> (i32, i32, i32) {
    %c0_i32 = arith.constant 0 : i32
    %c0_i32_0 = arith.constant 0 : i32
    %c0_i32_1 = arith.constant 0 : i32
    return %arg0, %c0_i32, %c0_i32_0 : i32, i32, i32
  }
  func.func @transform_2(%arg0: i32) -> (i32, i32, i32) {
    %c0_i32 = arith.constant 0 : i32
    %c0_i32_0 = arith.constant 0 : i32
    %c0_i32_1 = arith.constant 0 : i32
    return %arg0, %c0_i32, %c0_i32_0 : i32, i32, i32
  }
  func.func @transform_3(%arg0: i32) -> (i32, i32, i32) {
    %c0_i32 = arith.constant 0 : i32
    %c0_i32_0 = arith.constant 0 : i32
    %c0_i32_1 = arith.constant 0 : i32
    return %arg0, %c0_i32, %c0_i32_0 : i32, i32, i32
  }
  func.func @transform_4(%arg0: i32) -> (i32, i32, i32) {
    %c0_i32 = arith.constant 0 : i32
    %c0_i32_0 = arith.constant 0 : i32
    %c0_i32_1 = arith.constant 0 : i32
    return %arg0, %c0_i32, %c0_i32_0 : i32, i32, i32
  }
  func.func @transform_5(%arg0: i32) -> (i32, i32, i32) {
    %c0_i32 = arith.constant 0 : i32
    %c0_i32_0 = arith.constant 0 : i32
    %c0_i32_1 = arith.constant 0 : i32
    return %arg0, %c0_i32, %c0_i32_0 : i32, i32, i32
  }
}

</mosaic_0001>

<llo_original>
// kernel: gat_forward.2
$region0: #{gat_forward.2}
  #allocation0 [shape = 'u32[]', space=smem, size = 0x4, offset = 0x4, fixed_abs, tag = 'smem constant byte address 0x4 - core index']
  #allocation1 [shape = 'u32[72,128]{1,0:T(1,128)}', space=vmem, size = 0x9000, scoped, tag = 'internal scratch']
  %s0 = inlined_call_operand.vmem [shape: f32[8,16], index: 0, kind: input, shape index: {}]
  %s1 = inlined_call_operand.vmem [shape: f32[16,128], index: 1, kind: input, shape index: {}]
  %s2 = inlined_call_operand.vmem [shape: f32[8,128], index: 2, kind: output, shape index: {}]
  %s3 = sld [smem:[#allocation0]]
  $region18: #{gat_forward.2} parent=0
    _
  %s5 = ssub.s32 1, %s3
  %s6 = scalar_select 0, %s5, %s3
  // Predicated region
  $region2: #{gat_forward.2} parent=0 // pred_check
    _
  $region3: #{gat_forward.2} parent=0 // pred_check_branch
    %8 = sbr.rel (0) target = $region5
  $region4: #{gat_forward.2} parent=0 // pred_region
    _
  $region5: #{gat_forward.2} parent=0 // pred_fallthru
    _
  // Predicated region
  $region6: #{gat_forward.2} parent=0 // pred_check
    _
  $region7: #{gat_forward.2} parent=0 // pred_check_branch
    %10 = sbr.rel (0) target = $region9
  $region8: #{gat_forward.2} parent=0 // pred_region
    _
  $region9: #{gat_forward.2} parent=0 // pred_fallthru
    _
  %v11 = vld [vmem:[%s0] sm:$0xff]
  %v12 = vld [vmem:[%s1] sm:$0xff]
  %v13 = vld [vmem:[%s1 + $0x8] sm:$0xff]
  %vm14 = vcmask 130048
  %v16 = vsel %vm14, %v11, 0
  %18 = vmatpush.msra.mxu0 0.0
  %19 = vmatpush.msra.mxu0 0.0
  %20 = vmatpush.msra.mxu0 0.0
  %21 = vmatpush.msra.mxu0 0.0
  %22 = vmatpush.msra.mxu0 0.0
  %23 = vmatpush.msra.mxu0 0.0
  %24 = vmatpush.msra.mxu0 0.0
  %25 = vmatpush.msra.mxu0 0.0
  %26 = vmatpush.msra.mxu0 0.0
  %27 = vmatpush.msra.mxu0 0.0
  %28 = vmatpush.msra.mxu0 0.0
  %29 = vmatpush.msra.mxu0 0.0
  %30 = vmatpush.msra.mxu0 0.0
  %31 = vmatpush.msra.mxu0 0.0
  %32 = vmatpush.msra.mxu0 %v13
  %33 = vmatpush.msra.mxu0 %v12
  %34 = vmatmul.f32.gmra.mxu0 %v16
  %v35 = vpop.f32.mrf.mxu0
  %v36 = vadd.f32 0.0, %v35
  %37 = vdwg.mxu0
  %38 = vst [vmem:[%s2] sm:$0xff] %v36
  // Predicated region
  $region10: #{gat_forward.2} parent=0 // pred_check
    _
  $region11: #{gat_forward.2} parent=0 // pred_check_branch
    %40 = sbr.rel (0) target = $region13
  $region12: #{gat_forward.2} parent=0 // pred_region
    _
  $region13: #{gat_forward.2} parent=0 // pred_fallthru
    _
  // Predicated region
  $region14: #{gat_forward.2} parent=0 // pred_check
    _
  $region15: #{gat_forward.2} parent=0 // pred_check_branch
    %42 = sbr.rel (0) target = $region17
  $region16: #{gat_forward.2} parent=0 // pred_region
    _
  $region17: #{gat_forward.2} parent=0 // pred_fallthru
    _

// kernel: gat_forward.3
$region0: #{gat_forward.3}
  #allocation0 [shape = 'u32[]', space=smem, size = 0x4, offset = 0x4, fixed_abs, tag = 'smem constant byte address 0x4 - core index']
  #allocation1 [shape = 'u32[72,128]{1,0:T(1,128)}', space=vmem, size = 0x9000, scoped, tag = 'internal scratch']
  %s0 = inlined_call_operand.vmem [shape: f32[4,8,32], index: 0, kind: input, shape index: {}]
  %s1 = inlined_call_operand.vmem [shape: f32[4,8,32], index: 1, kind: input, shape index: {}]
  %s2 = inlined_call_operand.vmem [shape: f32[4,1,32], index: 2, kind: input, shape index: {}]
  %s3 = inlined_call_operand.vmem [shape: f32[4,32,8], index: 3, kind: input, shape index: {}]
  %s4 = inlined_call_operand.vmem [shape: f32[4,8,8], index: 4, kind: output, shape index: {0}]
  %s5 = inlined_call_operand.hbm [shape: f32[4,1,32], index: 5, kind: output, shape index: {1}]
  %6 = xla_tuple %s4, %s5
  %s7 = sld [smem:[#allocation0]]
  $region57: #{gat_forward.3} parent=0
    _
  %s9 = ssub.s32 1, %s7
  %s10 = scalar_select 0, %s9, %s7
  $region1: #{gat_forward.3} parent=0
    #allocation2 [shape = 'u8[1024]{0}', space=vmem, size = 0x400, scoped, tag = 'output window, operand 1']
    #allocation3 [shape = 's32[2]{0}', space=sflag, size = 0x8, scoped, tag = 'scoped memory for gat_forward.3']
    %11 = vsyncpa [#allocation3], 0
    %s12 = scalar_lea.sflag [#allocation3], 1
    %13 = vsyncpa %s12, 0
    loop: start=0, step=1, limit=6
    $region2: #{gat_forward.3} parent=1 // loop_pre_header
      _
    $region3: #{gat_forward.3} parent=1 // loop_header
      %s15 = sphi 0, %s19
      %p16 = scmp.ge.s32.totalorder %s15, 6
      %s25 = sphi 0, %s27
      %s28 = sphi 0, %s25
      %s29 = sphi 0, %s28
      %s45 = sphi 0, %s29
      %s51 = sphi 0, %s53
      %s54 = sphi 0, %s51
      %s55 = sphi 0, %s54
      %s71 = sphi 0, %s55
      %s77 = sphi 0, %s79
      %s80 = sphi 0, %s77
      %s81 = sphi 0, %s80
      %s97 = sphi 0, %s81
      %s103 = sphi 0, %s105
      %s106 = sphi 0, %s103
      %s107 = sphi 0, %s106
      %s123 = sphi 0, %s107
      %s129 = sphi 0, %s131
      %s132 = sphi 0, %s129
      %s133 = sphi 0, %s132
      %s149 = sphi 0, %s133
      %s155 = sphi 0, %s157
      %s158 = sphi 0, %s155
      %s159 = sphi 0, %s158
      %s175 = sphi 0, %s159
    $region4: #{gat_forward.3} parent=1 // loop_header_branch
      %18 = sbr.rel (%p16) target = $region8
    $region5: #{gat_forward.3} parent=1 // loop_body
      %s20 = ssub.s32 %s15, 1
      %s21 = ssub.s32 %s15, 2
      %s22 = sadd.s32 %s15, 1
      %s23 = ssub.s32 %s15, %s22
      %p24 = scmp.eq.s32.totalorder %s23, 0
      %s26 = sadd.s32 %s25, 1
      %s27 = scalar_select %p24, %s25, %s26
      %p30 = pneg %p24
      %p31 = scmp.eq.s32.totalorder %s15, 3
      %p32 = por %p30, %p31
      %p33 = scmp.ne.s32.totalorder %s25, %s28
      %p34 = scmp.eq.s32.totalorder %s15, 0
      %p35 = por %p33, %p34
      %p36 = scmp.ne.s32.totalorder %s25, %s28
      %p37 = scmp.eq.s32.totalorder %s20, 3
      %p38 = por %p36, %p37
      %p39 = scmp.ne.s32.totalorder %s28, %s29
      %p40 = scmp.eq.s32.totalorder %s20, 0
      %p41 = por %p39, %p40
      %p42 = scmp.ne.s32.totalorder %s28, %s29
      %p43 = scmp.eq.s32.totalorder %s21, 3
      %p44 = por %p42, %p43
      %p46 = scmp.ne.s32.totalorder %s29, %s45
      %p47 = scmp.eq.s32.totalorder %s21, 0
      %p48 = por %p46, %p47
      %s49 = ssub.s32 %s15, %s22
      %p50 = scmp.eq.s32.totalorder %s49, 0
      %s52 = sadd.s32 %s51, 1
      %s53 = scalar_select %p50, %s51, %s52
      %p56 = pneg %p50
      %p57 = scmp.eq.s32.totalorder %s15, 3
      %p58 = por %p56, %p57
      %p59 = scmp.ne.s32.totalorder %s51, %s54
      %p60 = scmp.eq.s32.totalorder %s15, 0
      %p61 = por %p59, %p60
      %p62 = scmp.ne.s32.totalorder %s51, %s54
      %p63 = scmp.eq.s32.totalorder %s20, 3
      %p64 = por %p62, %p63
      %p65 = scmp.ne.s32.totalorder %s54, %s55
      %p66 = scmp.eq.s32.totalorder %s20, 0
      %p67 = por %p65, %p66
      %p68 = scmp.ne.s32.totalorder %s54, %s55
      %p69 = scmp.eq.s32.totalorder %s21, 3
      %p70 = por %p68, %p69
      %p72 = scmp.ne.s32.totalorder %s55, %s71
      %p73 = scmp.eq.s32.totalorder %s21, 0
      %p74 = por %p72, %p73
      %s75 = ssub.s32 %s15, %s22
      %p76 = scmp.eq.s32.totalorder %s75, 0
      %s78 = sadd.s32 %s77, 1
      %s79 = scalar_select %p76, %s77, %s78
      %p82 = pneg %p76
      %p83 = scmp.eq.s32.totalorder %s15, 3
      %p84 = por %p82, %p83
      %p85 = scmp.ne.s32.totalorder %s77, %s80
      %p86 = scmp.eq.s32.totalorder %s15, 0
      %p87 = por %p85, %p86
      %p88 = scmp.ne.s32.totalorder %s77, %s80
      %p89 = scmp.eq.s32.totalorder %s20, 3
      %p90 = por %p88, %p89
      %p91 = scmp.ne.s32.totalorder %s80, %s81
      %p92 = scmp.eq.s32.totalorder %s20, 0
      %p93 = por %p91, %p92
      %p94 = scmp.ne.s32.totalorder %s80, %s81
      %p95 = scmp.eq.s32.totalorder %s21, 3
      %p96 = por %p94, %p95
      %p98 = scmp.ne.s32.totalorder %s81, %s97
      %p99 = scmp.eq.s32.totalorder %s21, 0
      %p100 = por %p98, %p99
      %s101 = ssub.s32 %s15, %s22
      %p102 = scmp.eq.s32.totalorder %s101, 0
      %s104 = sadd.s32 %s103, 1
      %s105 = scalar_select %p102, %s103, %s104
      %p108 = pneg %p102
      %p109 = scmp.eq.s32.totalorder %s15, 3
      %p110 = por %p108, %p109
      %p111 = scmp.ne.s32.totalorder %s103, %s106
      %p112 = scmp.eq.s32.totalorder %s15, 0
      %p113 = por %p111, %p112
      %p114 = scmp.ne.s32.totalorder %s103, %s106
      %p115 = scmp.eq.s32.totalorder %s20, 3
      %p116 = por %p114, %p115
      %p117 = scmp.ne.s32.totalorder %s106, %s107
      %p118 = scmp.eq.s32.totalorder %s20, 0
      %p119 = por %p117, %p118
      %p120 = scmp.ne.s32.totalorder %s106, %s107
      %p121 = scmp.eq.s32.totalorder %s21, 3
      %p122 = por %p120, %p121
      %p124 = scmp.ne.s32.totalorder %s107, %s123
      %p125 = scmp.eq.s32.totalorder %s21, 0
      %p126 = por %p124, %p125
      %s127 = ssub.s32 %s15, %s22
      %p128 = scmp.eq.s32.totalorder %s127, 0
      %s130 = sadd.s32 %s129, 1
      %s131 = scalar_select %p128, %s129, %s130
      %p134 = pneg %p128
      %p135 = scmp.eq.s32.totalorder %s15, 3
      %p136 = por %p134, %p135
      %p137 = scmp.ne.s32.totalorder %s129, %s132
      %p138 = scmp.eq.s32.totalorder %s15, 0
      %p139 = por %p137, %p138
      %p140 = scmp.ne.s32.totalorder %s129, %s132
      %p141 = scmp.eq.s32.totalorder %s20, 3
      %p142 = por %p140, %p141
      %p143 = scmp.ne.s32.totalorder %s132, %s133
      %p144 = scmp.eq.s32.totalorder %s20, 0
      %p145 = por %p143, %p144
      %p146 = scmp.ne.s32.totalorder %s132, %s133
      %p147 = scmp.eq.s32.totalorder %s21, 3
      %p148 = por %p146, %p147
      %p150 = scmp.ne.s32.totalorder %s133, %s149
      %p151 = scmp.eq.s32.totalorder %s21, 0
      %p152 = por %p150, %p151
      %s153 = ssub.s32 %s15, %s22
      %p154 = scmp.eq.s32.totalorder %s153, 0
      %s156 = sadd.s32 %s155, 1
      %s157 = scalar_select %p154, %s155, %s156
      %p160 = pneg %p154
      %p161 = scmp.eq.s32.totalorder %s15, 3
      %p162 = por %p160, %p161
      %p163 = scmp.ne.s32.totalorder %s155, %s158
      %p164 = scmp.eq.s32.totalorder %s15, 0
      %p165 = por %p163, %p164
      %p166 = scmp.ne.s32.totalorder %s155, %s158
      %p167 = scmp.eq.s32.totalorder %s20, 3
      %p168 = por %p166, %p167
      %p169 = scmp.ne.s32.totalorder %s158, %s159
      %p170 = scmp.eq.s32.totalorder %s20, 0
      %p171 = por %p169, %p170
      %p172 = scmp.ne.s32.totalorder %s158, %s159
      %p173 = scmp.eq.s32.totalorder %s21, 3
      %p174 = por %p172, %p173
      %p176 = scmp.ne.s32.totalorder %s159, %s175
      %p177 = scmp.eq.s32.totalorder %s21, 0
      %p178 = por %p176, %p177
      %p179 = scmp.le.s32.totalorder 1, %s15
      %p180 = scmp.lt.s32.totalorder %s15, 5
      %p181 = pnand %p179, %p180
      %p182 = pneg %p181
      // Predicated region
      $region9: #{gat_forward.3} parent=5 // pred_check
        _
      $region10: #{gat_forward.3} parent=5 // pred_check_branch
        %184 = sbr.rel (%p181) target = $region12
      $region11: #{gat_forward.3} parent=5 // pred_region
        %s185 = ssub.s32 %s15, 1
      $region12: #{gat_forward.3} parent=5 // pred_fallthru
        _
      %p186 = scmp.lt.s32.totalorder %s15, 4
      // Predicated region
      $region13: #{gat_forward.3} parent=5 // pred_check
        %p187 = pneg %p186
      $region14: #{gat_forward.3} parent=5 // pred_check_branch
        %189 = sbr.rel (%p187) target = $region16
      $region15: #{gat_forward.3} parent=5 // pred_region
        // Predicated region
        $region17: #{gat_forward.3} parent=15 // pred_check
          %p190 = pneg %p35
        $region18: #{gat_forward.3} parent=15 // pred_check_branch
          %192 = sbr.rel (%p190) target = $region20
        $region19: #{gat_forward.3} parent=15 // pred_region
          %p193 = scmp.lt.s32.totalorder %s15, 3
          %s194 = scalar_select %p193, %s15, 3
          %s195 = smul.addr %s194, 8
          %s196 = scalar_lea.vmem %s0, %s195
        $region20: #{gat_forward.3} parent=15 // pred_fallthru
          _
        // Predicated region
        $region21: #{gat_forward.3} parent=15 // pred_check
          %p197 = pneg %p61
        $region22: #{gat_forward.3} parent=15 // pred_check_branch
          %199 = sbr.rel (%p197) target = $region24
        $region23: #{gat_forward.3} parent=15 // pred_region
          %p200 = scmp.lt.s32.totalorder %s15, 3
          %s201 = scalar_select %p200, %s15, 3
          %s202 = smul.addr %s201, 8
          %s203 = scalar_lea.vmem %s1, %s202
        $region24: #{gat_forward.3} parent=15 // pred_fallthru
          _
        // Predicated region
        $region25: #{gat_forward.3} parent=15 // pred_check
          %p204 = pneg %p87
        $region26: #{gat_forward.3} parent=15 // pred_check_branch
          %206 = sbr.rel (%p204) target = $region28
        $region27: #{gat_forward.3} parent=15 // pred_region
          %p207 = scmp.lt.s32.totalorder %s15, 3
          %s208 = scalar_select %p207, %s15, 3
          %s209 = scalar_lea.vmem %s2, %s208
        $region28: #{gat_forward.3} parent=15 // pred_fallthru
          _
        // Predicated region
        $region29: #{gat_forward.3} parent=15 // pred_check
          %p210 = pneg %p113
        $region30: #{gat_forward.3} parent=15 // pred_check_branch
          %212 = sbr.rel (%p210) target = $region32
        $region31: #{gat_forward.3} parent=15 // pred_region
          %p213 = scmp.lt.s32.totalorder %s15, 3
          %s214 = scalar_select %p213, %s15, 3
          %s215 = smul.addr %s214, 4
          %s216 = smul.addr %s215, 8
          %s217 = scalar_lea.vmem %s3, %s216
        $region32: #{gat_forward.3} parent=15 // pred_fallthru
          _
      $region16: #{gat_forward.3} parent=5 // pred_fallthru
        _
      %p218 = scmp.le.s32.totalorder 1, %s15
      %p219 = scmp.lt.s32.totalorder %s15, 5
      %p220 = pnand %p218, %p219
      %p221 = pneg %p220
      // Predicated region
      $region33: #{gat_forward.3} parent=5 // pred_check
        _
      $region34: #{gat_forward.3} parent=5 // pred_check_branch
        %223 = sbr.rel (%p220) target = $region36
      $region35: #{gat_forward.3} parent=5 // pred_region
        %s224 = ssub.s32 %s15, 1
        %p225 = scmp.lt.s32.totalorder %s20, 3
        %s226 = scalar_select %p225, %s20, 3
        %s227 = smul.addr %s226, 8
        %s228 = scalar_lea.vmem %s0, %s227
        %p229 = pneg %p41
        %p230 = pneg %p38
        %p231 = scmp.lt.s32.totalorder %s20, 3
        %s232 = scalar_select %p231, %s20, 3
        %s233 = smul.addr %s232, 8
        %s234 = scalar_lea.vmem %s1, %s233
        %p235 = pneg %p67
        %p236 = pneg %p64
        %p237 = scmp.lt.s32.totalorder %s20, 3
        %s238 = scalar_select %p237, %s20, 3
        %s239 = scalar_lea.vmem %s2, %s238
        %p240 = pneg %p93
        %p241 = pneg %p90
        %p242 = scmp.lt.s32.totalorder %s20, 3
        %s243 = scalar_select %p242, %s20, 3
        %s244 = smul.addr %s243, 4
        %s245 = smul.addr %s244, 8
        %s246 = scalar_lea.vmem %s3, %s245
        %p247 = pneg %p119
        %p248 = pneg %p116
        %p249 = pneg %p145
        %p250 = pneg %p142
        %p251 = scmp.lt.s32.totalorder %s20, 3
        %s252 = scalar_select %p251, %s20, 3
        %s253 = smul.addr %s252, 8
        %s254 = scalar_lea.vmem %s4, %s253
        %p255 = pneg %p171
        %p256 = pneg %p168
        %s257 = sand.u32 %s158, 1
        %s258 = scalar_lea.sflag [#allocation3], %s257
        %s259 = sand.u32 %s158, 1
        %s260 = scalar_lea.vmem [#allocation2], %s259
        %p261 = scmp.lt.s32.totalorder %s20, 3
        %s262 = scalar_select %p261, %s20, 3
        %s263 = smul.addr %s262, 8
        %s264 = scalar_lea.vmem %s0, %s263
        %p265 = scmp.lt.s32.totalorder %s20, 3
        %s266 = scalar_select %p265, %s20, 3
        %s267 = smul.addr %s266, 8
        %s268 = scalar_lea.vmem %s1, %s267
        %p269 = scmp.lt.s32.totalorder %s20, 3
        %s270 = scalar_select %p269, %s20, 3
        %s271 = scalar_lea.vmem %s2, %s270
        %p272 = scmp.lt.s32.totalorder %s20, 3
        %s273 = scalar_select %p272, %s20, 3
        %s274 = smul.addr %s273, 4
        %s275 = smul.addr %s274, 8
        %s276 = scalar_lea.vmem %s3, %s275
        %p277 = scmp.lt.s32.totalorder %s20, 3
        %s278 = scalar_select %p277, %s20, 3
        %s279 = smul.addr %s278, 8
        %s280 = scalar_lea.vmem %s4, %s279
        %v281 = vld [vmem:[%s264] sm:$0xff]
        %v282 = vld [vmem:[%s268] sm:$0xff]
        %v283 = vld [vmem:[%s271] sm:$0x1]
        %v284 = vld [vmem:[%s276] sm:$0xff]
        %v285 = vld [vmem:[%s276 + $0x8] sm:$0xff]
        %v286 = vld [vmem:[%s276 + $0x10] sm:$0xff]
        %v287 = vld [vmem:[%s276 + $0x18] sm:$0xff]
        %v289 = vperm.slane %v283, 0
        %v291 = vmul.f32 %v282, %v289
        %vm292 = vcmask 261120
        %v293 = vsel %vm292, %v291, 0.0
        %294 = vadd.xlane.f32.xlu0 %v293
        %v295 = vpop.xlane.xlu0 %294
        %v297 = vsel %vm292, %v281, 0
        %299 = vmatpush.msra.mxu0 0.0
        %300 = vmatpush.msra.mxu0 0.0
        %301 = vmatpush.msra.mxu0 0.0
        %302 = vmatpush.msra.mxu0 0.0
        %303 = vmatpush.msra.mxu0 0.0
        %304 = vmatpush.msra.mxu0 0.0
        %305 = vmatpush.msra.mxu0 0.0
        %306 = vmatpush.msra.mxu0 0.0
        %307 = vmatpush.msra.mxu0 0.0
        %308 = vmatpush.msra.mxu0 0.0
        %309 = vmatpush.msra.mxu0 0.0
        %310 = vmatpush.msra.mxu0 0.0
        %311 = vmatpush.msra.mxu0 %v287
        %312 = vmatpush.msra.mxu0 %v286
        %313 = vmatpush.msra.mxu0 %v285
        %314 = vmatpush.msra.mxu0 %v284
        %315 = vmatmul.f32.gmra.mxu0 %v297
        %v316 = vpop.f32.mrf.mxu0
        %v317 = vadd.f32 0.0, %v316
        %318 = vdwg.mxu0
        %v319 = vadd.f32 %v295, %v317
        %vm320 = vcmp.ge.f32.partialorder %v319, 0.0
        %v321 = vmul.f32 %v319, 0.2
        %v322 = vsel %vm320, %v319, %v321
        %vm323 = vcmask 64512
        %v324 = vsel %vm323, %v322, -inf
        %325 = vmax.xlane.f32.xlu0 %v324
        %v326 = vpop.xlane.xlu0 %325
        %v327 = vrot.slane %v326, 4
        %v328 = vmax.f32 %v326, %v327
        %v329 = vrot.slane %v328, 2
        %v330 = vmax.f32 %v328, %v329
        %v331 = vrot.slane %v330, 1
        %v332 = vmax.f32 %v330, %v331
        %v333 = vsub.f32 %v322, %v332
        %v334 = vmul.f32 %v333, 1.442695
        %v335 = vpow.pop %v334
        %v336 = vsel %vm323, %v335, 0.0
        %337 = vadd.xlane.f32.xlu0 %v336
        %v338 = vpop.xlane.xlu0 %337
        %v339 = vrot.slane %v338, 4
        %v340 = vadd.f32 %v338, %v339
        %v341 = vrot.slane %v340, 2
        %v342 = vadd.f32 %v340, %v341
        %v343 = vrot.slane %v342, 1
        %v344 = vadd.f32 %v342, %v343
        %v345 = vrcp.pop %v344
        %v346 = vmul.f32 %v344, %v345
        %v347 = vsub.f32 1.0, %v346
        %v348 = vmul.f32 %v345, %v347
        %v349 = vadd.f32 %v345, %v348
        %vm350 = vweird.f32 %v344
        %vm351 = vweird.f32 %v345
        %vm352 = vmor %vm350, %vm351
        %v353 = vsel %vm352, %v345, %v349
        %v354 = vand.u32 2147483647, %v344
        %vm355 = vcmp.eq.f32.partialorder %v354, 8.507059e+37
        %v356 = vand.u32 %v344, 2147483648
        %v357 = vor.u32 1.1754944e-38, %v356
        %v358 = vsel %vm355, %v357, %v353
        %v359 = vmul.f32 %v335, %v358
        %360 = vst.msk [vmem:[%s280] sm:$0xff] %vm323, %v359
        %v361 = vsel %vm323, %v359, 0.0
        %362 = vadd.xlane.f32.xlu0 %v361
        %v363 = vpop.xlane.xlu0 %362
        %v364 = vmul.f32 %v363, %v281
        %v365 = vsel %vm292, %v364, 0.0
        %v366 = vrot.slane %v365, 4
        %v367 = vadd.f32 %v365, %v366
        %v368 = vrot.slane %v367, 2
        %v369 = vadd.f32 %v367, %v368
        %v370 = vrot.slane %v369, 1
        %v371 = vadd.f32 %v369, %v370
        %vm372 = vcmask 253952
        %373 = vst.msk [vmem:[%s260] sm:$0x1] %vm372, %v371
        %p374 = scmp.lt.s32.totalorder %s20, 3
        %s375 = scalar_select %p374, %s20, 3
        %s376 = smul.addr %s375, 8
        %s377 = scalar_lea.vmem %s4, %s376
        %s378 = sand.u32 %s158, 1
        %s379 = scalar_lea.sflag [#allocation3], %s378
        %s380 = sand.u32 %s158, 1
        %s381 = scalar_lea.vmem [#allocation2], %s380
        // Predicated region
        $region37: #{gat_forward.3} parent=35 // pred_check
          %p382 = pneg %p142
        $region38: #{gat_forward.3} parent=35 // pred_check_branch
          %384 = sbr.rel (%p382) target = $region40
        $region39: #{gat_forward.3} parent=35 // pred_region
          _
        $region40: #{gat_forward.3} parent=35 // pred_fallthru
          _
        // Predicated region
        $region41: #{gat_forward.3} parent=35 // pred_check
          %p385 = pneg %p168
        $region42: #{gat_forward.3} parent=35 // pred_check_branch
          %387 = sbr.rel (%p385) target = $region44
        $region43: #{gat_forward.3} parent=35 // pred_region
          %389 = vsyncadd %s379, 0
          %s390 = scalar_lea.hbm %s5, %s20
          %s392 = sshll.u32 %s381, 4
          %s393 = int_to_ptr.vmem [resolvable:$true] %s392
          %s394 = sshll.u32 %s390, 4
          %s395 = int_to_ptr.hbm [resolvable:$true] %s394
          %397 = dma.vmem_to_hbm [thread:$0]  %s393, 16, %s395, %s379
        $region44: #{gat_forward.3} parent=35 // pred_fallthru
          _
      $region36: #{gat_forward.3} parent=5 // pred_fallthru
        _
      %p398 = scmp.le.s32.totalorder 2, %s15
      // Predicated region
      $region45: #{gat_forward.3} parent=5 // pred_check
        %p399 = pneg %p398
      $region46: #{gat_forward.3} parent=5 // pred_check_branch
        %401 = sbr.rel (%p399) target = $region48
      $region47: #{gat_forward.3} parent=5 // pred_region
        %s402 = ssub.s32 %s15, 2
        // Predicated region
        $region49: #{gat_forward.3} parent=47 // pred_check
          %p403 = pneg %p148
        $region50: #{gat_forward.3} parent=47 // pred_check_branch
          %405 = sbr.rel (%p403) target = $region52
        $region51: #{gat_forward.3} parent=47 // pred_region
          %p406 = scmp.lt.s32.totalorder %s21, 3
          %s407 = scalar_select %p406, %s21, 3
          %s408 = smul.addr %s407, 8
          %s409 = scalar_lea.vmem %s4, %s408
        $region52: #{gat_forward.3} parent=47 // pred_fallthru
          _
        // Predicated region
        $region53: #{gat_forward.3} parent=47 // pred_check
          %p410 = pneg %p174
        $region54: #{gat_forward.3} parent=47 // pred_check_branch
          %412 = sbr.rel (%p410) target = $region56
        $region55: #{gat_forward.3} parent=47 // pred_region
          %s413 = sand.u32 %s159, 1
          %s414 = scalar_lea.sflag [#allocation3], %s413
          %s415 = sand.u32 %s159, 1
          %s416 = scalar_lea.vmem [#allocation2], %s415
          %418 = dma.done %s414, 16
        $region56: #{gat_forward.3} parent=47 // pred_fallthru
          _
      $region48: #{gat_forward.3} parent=5 // pred_fallthru
        _
    $region6: #{gat_forward.3} parent=1 // loop_footer
      %s19 = sadd.s32 1, %s15
    $region7: #{gat_forward.3} parent=1 // loop_footer_branch
      %14 = sbr.rel target = $region3
    $region8: #{gat_forward.3} parent=1 // loop_exit
      _
    %419 = vsyncpa [#allocation3], 1
    %s420 = scalar_lea.sflag [#allocation3], 1
    %421 = vsyncpa %s420, 1

</llo_original>
